<compile_context>
chip_gen: v7x
topology: tpu7x:2x2x1
jax: 0.10.0
libtpu: 0.0.40
codegen_flags: <defaults>
</compile_context>

<pallas_src>
import jax
import jax.numpy as jnp
from jax.experimental import pallas as pl
from jax.experimental.pallas import tpu as pltpu


_LANES = 128

# Pipeline-buffer budget for one fused pallas_call:
#   per grid step VMEM ~= n_tensors * (1 in + 1 out) * 2 (double-buffer) * block_bytes
# 16 MiB of pipeline buffers is safe on every generation (v5e/v6e 128 MiB VMEM,
# v7x 64 MiB VMEM).
_PIPELINE_VMEM_BUDGET = 16 << 20

# Explicit scoped-VMEM limit handed to the compiler: pipeline budget + headroom,
# still far below v7x's 64 MiB physical VMEM (do NOT copy 64-96 MiB settings
# from v5e/v6e configs).
_VMEM_LIMIT_BYTES = 24 << 20

# Cap per-tensor block bytes near the measured ~85%-of-roofline sweet spot.
_MAX_BLOCK_BYTES_PER_TENSOR = 2 << 20

# Below this aggregate group size, kernel launch + pipeline warm-up (microseconds)
# dominates the copy (nanoseconds): skip Pallas and just return the reshaped views.
_MIN_PALLAS_BYTES = 1 << 20


def _identity_copy_kernel(*refs):
    # refs = (x_0, ..., x_{n-1}, o_0, ..., o_{n-1}); straight VMEM copies.
    half = len(refs) // 2
    for x_ref, o_ref in zip(refs[:half], refs[half:]):
        o_ref[...] = x_ref[...]


def _block_rows(rows: int, n: int, itemsize: int) -> int:
    """Lane-dense block height that fits the VMEM pipeline budget for n fused tensors."""
    sublane = max(1, 32 // itemsize)  # 8 f32 / 16 bf16 / 32 int8
    if rows <= 2 * sublane:
        # Tiny: one full-extent block (legal via the "block equals full dims" exception).
        return rows
    per_row_bytes = _LANES * itemsize
    # n tensors * (in + out) * double-buffer = 4*n live buffers of block_bytes.
    budget_rows = _PIPELINE_VMEM_BUDGET // (4 * n * per_row_bytes)
    cap_rows = _MAX_BLOCK_BYTES_PER_TENSOR // per_row_bytes
    br = min(budget_rows, cap_rows)
    if br >= rows:
        # Whole tensor would fit in one block: split into >=2 grid steps anyway so
        # both TensorCores get DMA work on megacore parts (v7x has 2 TCs/chip).
        br = (rows + 1) // 2
    br = max(sublane, (br // sublane) * sublane)  # dtype sublane multiple
    return min(rows, br)


def _fused_identity_copy_2d(views, donate_inputs):
    """Copy same-shape/dtype (rows, 128) views with ONE variadic pallas_call."""
    n = len(views)
    rows = views[0].shape[0]
    dtype = views[0].dtype
    itemsize = jnp.dtype(dtype).itemsize

    br = _block_rows(rows, n, itemsize)
    grid = (pl.cdiv(rows, br),)
    spec = pl.BlockSpec((br, _LANES), lambda i: (i, 0))

    kwargs = {}
    if donate_inputs:
        # Only alias when the caller guarantees donatable inputs; aliasing a
        # non-donated input makes XLA insert a hidden defensive copy.
        kwargs["input_output_aliases"] = {i: i for i in range(n)}

    outs = pl.pallas_call(
        _identity_copy_kernel,
        out_shape=tuple(
            jax.ShapeDtypeStruct((rows, _LANES), dtype) for _ in range(n)
        ),
        grid_spec=pltpu.PrefetchScalarGridSpec(
            num_scalar_prefetch=0,
            grid=grid,
            in_specs=[spec] * n,
            out_specs=[spec] * n,
        ),
        compiler_params=pltpu.CompilerParams(
            dimension_semantics=("parallel",),
            vmem_limit_bytes=_VMEM_LIMIT_BYTES,
        ),
        # Pure memory op: tell XLA's scheduler so it can overlap surrounding HLO.
        cost_estimate=pl.CostEstimate(
            flops=0,
            transcendentals=0,
            bytes_accessed=2 * n * rows * _LANES * itemsize,
        ),
        **kwargs,
    )(*views)
    return list(outs)


def multi_ip_adapter_identity(
    image_embeds,
    num_image_text_embeds,
    *,
    min_pallas_bytes=_MIN_PALLAS_BYTES,
    donate_inputs=False,
):
    """JAX/Pallas equivalent of MultiIPAdapterIdentity.forward.

    image_embeds: list of arrays, each with leading batch dim.
    Returns a list of arrays of shape (batch, num_image_text_embeds, -1).
    """
    if not image_embeds:
        return []
    batch = image_embeds[0].shape[0]

    # Metadata-only reshape (the actual PyTorch semantics) done in JAX glue.
    reshaped = [
        jnp.reshape(ie, (batch, num_image_text_embeds, -1)) for ie in image_embeds
    ]

    # Group tensors that share (flat size, dtype): one variadic pallas_call per group.
    groups = {}
    for idx, r in enumerate(reshaped):
        groups.setdefault((int(r.size), jnp.dtype(r.dtype)), []).append(idx)

    outputs = list(reshaped)
    for (total, dtype), idxs in groups.items():
        group_bytes = len(idxs) * total * dtype.itemsize
        # Skip Pallas when (a) the group is tiny (launch overhead >> copy), or
        # (b) the element count is not 128-aligned.  The reshape is metadata-only,
        # so no copy is needed for correctness; skipping (b) avoids staging whole
        # misaligned arrays in VMEM (would be fatal on v7x's 64 MiB).
        if total == 0 or group_bytes < min_pallas_bytes or total % _LANES != 0:
            continue
        rows = total // _LANES
        views = [reshaped[i].reshape(rows, _LANES) for i in idxs]
        copies = _fused_identity_copy_2d(views, donate_inputs)
        for i, c in zip(idxs, copies):
            outputs[i] = c.reshape(reshaped[i].shape)
    return outputs


if __name__ == "__main__":
    key = jax.random.PRNGKey(0)
    k0, k1, k2, k3, k4 = jax.random.split(key, 5)

    batch = 2
    num_image_text_embeds = 4
    hidden = 32

    # Small "image embeds" with different trailing layouts (fast, copy-free path)...
    ie0 = jax.random.normal(k0, (batch, num_image_text_embeds * hidden), jnp.float32)
    ie1 = jax.random.normal(k1, (batch, num_image_text_embeds, hidden), jnp.float32)
    ie2 = jax.random.normal(k2, (batch, 2, 2, hidden), jnp.float32)  # 2*2 == N
    # ...one whose flat size is NOT a multiple of 128 (copy-free path as well)...
    ie3 = jax.random.normal(k3, (batch, num_image_text_embeds * 33), jnp.float32)
    # ...and one large enough (2 MiB f32) to exercise the fused Pallas copy kernel.
    big_hidden = 65536
    ie4 = jax.random.normal(
        k4, (batch, num_image_text_embeds * big_hidden), jnp.float32
    )

    inputs = [ie0, ie1, ie2, ie3, ie4]

    outs = multi_ip_adapter_identity(inputs, num_image_text_embeds)
    outs = [jax.block_until_ready(o) for o in outs]

    # Verify against the pure-JAX reference (same semantics as the PyTorch module).
    ok = True
    for x, o in zip(inputs, outs):
        ref = jnp.reshape(x, (batch, num_image_text_embeds, -1))
        ok = ok and (o.shape == ref.shape) and bool(jnp.array_equal(o, ref))

    print("KERNEL_OK" if ok else "KERNEL_MISMATCH")
</pallas_src>

<mosaic_0001>
module attributes {stable_mosaic.version = 11 : i64} {
  func.func @_identity_copy_kernel(%arg0: i32, %arg1: memref<2048x128xf32, #tpu.memory_space<vmem>>, %arg2: memref<2048x128xf32, #tpu.memory_space<vmem>>) attributes {dimension_semantics = [#tpu.dimension_semantics<parallel>], iteration_bounds = array<i64: 2>, scalar_prefetch = 0 : i64, scratch_operands = 0 : i64, tpu.core_type = #tpu.core_type<tc>, window_params = [{transform_indices = @transform_0, window_bounds = array<i64: 2048, 128>}, {transform_indices = @transform_1, window_bounds = array<i64: 2048, 128>}]} {
    %c0 = arith.constant 0 : index
    %c0_0 = arith.constant 0 : index
    %0 = vector.load %arg1[%c0, %c0_0] : memref<2048x128xf32, #tpu.memory_space<vmem>>, vector<2048x128xf32>
    %c0_1 = arith.constant 0 : index
    %c0_2 = arith.constant 0 : index
    %1 = vector.load %arg2[%c0_1, %c0_2] : memref<2048x128xf32, #tpu.memory_space<vmem>>, vector<2048x128xf32>
    tpu.vector_store %arg2[%c0_1, %c0_2], %0 {strides = array<i32>} : memref<2048x128xf32, #tpu.memory_space<vmem>>, vector<2048x128xf32>,
    return
  }
  func.func @transform_0(%arg0: i32) -> (i32, i32) {
    %c0_i32 = arith.constant 0 : i32
    %c0_i32_0 = arith.constant 0 : i32
    return %arg0, %c0_i32 : i32, i32
  }
  func.func @transform_1(%arg0: i32) -> (i32, i32) {
    %c0_i32 = arith.constant 0 : i32
    %c0_i32_0 = arith.constant 0 : i32
    return %arg0, %c0_i32 : i32, i32
  }
}

</mosaic_0001>

<llo_original>
// kernel: tpu_custom_call.1
$region0: #{tpu_custom_call.1}
  #allocation0 [shape = 'u32[]', space=smem, size = 0x4, offset = 0x4, fixed_abs, tag = 'smem constant byte address 0x4 - core index']
  #allocation1 [shape = 'u32[144,128]{1,0:T(1,128)}', space=vmem, size = 0x12000, scoped, tag = 'internal scratch']
  %s0 = inlined_call_operand.hbm [shape: f32[4096,128], index: 0, kind: input, shape index: {}]
  %s1 = inlined_call_operand.hbm [shape: f32[4096,128], index: 1, kind: output, shape index: {}]
  %s2 = sld [smem:[#allocation0]]
  $region41: #{tpu_custom_call.1} parent=0
    _
  %s4 = ssub.s32 1, %s2
  %s5 = scalar_select 0, %s4, %s2
  $region1: #{tpu_custom_call.1} parent=0
    #allocation2 [shape = 'u8[2097152]{0}', space=vmem, size = 0x200000, scoped, tag = 'input window, operand 0']
    #allocation3 [shape = 's32[2]{0}', space=sflag, size = 0x8, scoped, tag = 'scoped memory for tpu_custom_call.1']
    #allocation4 [shape = 's32[2]{0}', space=sflag, size = 0x8, scoped, tag = 'scoped memory for tpu_custom_call.1']
    #allocation5 [shape = 'u8[2097152]{0}', space=vmem, size = 0x200000, scoped, tag = 'output window, operand 0']
    %6 = vsyncpa [#allocation3], 0
    %s7 = scalar_lea.sflag [#allocation3], 1
    %8 = vsyncpa %s7, 0
    %9 = vsyncpa [#allocation4], 0
    %s10 = scalar_lea.sflag [#allocation4], 1
    %11 = vsyncpa %s10, 0
    loop: start=0, step=1, limit=4
    $region2: #{tpu_custom_call.1} parent=1 // loop_pre_header
      _
    $region3: #{tpu_custom_call.1} parent=1 // loop_header
      %s13 = sphi 0, %s17
      %p14 = scmp.ge.s32.totalorder %s13, 4
      %s23 = sphi 0, %s25
      %s26 = sphi 0, %s23
      %s27 = sphi 0, %s26
      %s43 = sphi 0, %s27
      %s49 = sphi 0, %s51
      %s52 = sphi 0, %s49
      %s53 = sphi 0, %s52
      %s69 = sphi 0, %s53
    $region4: #{tpu_custom_call.1} parent=1 // loop_header_branch
      %16 = sbr.rel (%p14) target = $region8
    $region5: #{tpu_custom_call.1} parent=1 // loop_body
      %s18 = ssub.s32 %s13, 1
      %s19 = ssub.s32 %s13, 2
      %s20 = sadd.s32 %s13, 1
      %s21 = ssub.s32 %s13, %s20
      %p22 = scmp.eq.s32.totalorder %s21, 0
      %s24 = sadd.s32 %s23, 1
      %s25 = scalar_select %p22, %s23, %s24
      %p28 = pneg %p22
      %p29 = scmp.eq.s32.totalorder %s13, 1
      %p30 = por %p28, %p29
      %p31 = scmp.ne.s32.totalorder %s23, %s26
      %p32 = scmp.eq.s32.totalorder %s13, 0
      %p33 = por %p31, %p32
      %p34 = scmp.ne.s32.totalorder %s23, %s26
      %p35 = scmp.eq.s32.totalorder %s18, 1
      %p36 = por %p34, %p35
      %p37 = scmp.ne.s32.totalorder %s26, %s27
      %p38 = scmp.eq.s32.totalorder %s18, 0
      %p39 = por %p37, %p38
      %p40 = scmp.ne.s32.totalorder %s26, %s27
      %p41 = scmp.eq.s32.totalorder %s19, 1
      %p42 = por %p40, %p41
      %p44 = scmp.ne.s32.totalorder %s27, %s43
      %p45 = scmp.eq.s32.totalorder %s19, 0
      %p46 = por %p44, %p45
      %s47 = ssub.s32 %s13, %s20
      %p48 = scmp.eq.s32.totalorder %s47, 0
      %s50 = sadd.s32 %s49, 1
      %s51 = scalar_select %p48, %s49, %s50
      %p54 = pneg %p48
      %p55 = scmp.eq.s32.totalorder %s13, 1
      %p56 = por %p54, %p55
      %p57 = scmp.ne.s32.totalorder %s49, %s52
      %p58 = scmp.eq.s32.totalorder %s13, 0
      %p59 = por %p57, %p58
      %p60 = scmp.ne.s32.totalorder %s49, %s52
      %p61 = scmp.eq.s32.totalorder %s18, 1
      %p62 = por %p60, %p61
      %p63 = scmp.ne.s32.totalorder %s52, %s53
      %p64 = scmp.eq.s32.totalorder %s18, 0
      %p65 = por %p63, %p64
      %p66 = scmp.ne.s32.totalorder %s52, %s53
      %p67 = scmp.eq.s32.totalorder %s19, 1
      %p68 = por %p66, %p67
      %p70 = scmp.ne.s32.totalorder %s53, %s69
      %p71 = scmp.eq.s32.totalorder %s19, 0
      %p72 = por %p70, %p71
      %p73 = scmp.le.s32.totalorder 1, %s13
      %p74 = scmp.lt.s32.totalorder %s13, 3
      %p75 = pnand %p73, %p74
      %p76 = pneg %p75
      // Predicated region
      $region9: #{tpu_custom_call.1} parent=5 // pred_check
        _
      $region10: #{tpu_custom_call.1} parent=5 // pred_check_branch
        %78 = sbr.rel (%p75) target = $region12
      $region11: #{tpu_custom_call.1} parent=5 // pred_region
        %s79 = ssub.s32 %s13, 1
      $region12: #{tpu_custom_call.1} parent=5 // pred_fallthru
        _
      %p80 = scmp.lt.s32.totalorder %s13, 2
      // Predicated region
      $region13: #{tpu_custom_call.1} parent=5 // pred_check
        %p81 = pneg %p80
      $region14: #{tpu_custom_call.1} parent=5 // pred_check_branch
        %83 = sbr.rel (%p81) target = $region16
      $region15: #{tpu_custom_call.1} parent=5 // pred_region
        // Predicated region
        $region17: #{tpu_custom_call.1} parent=15 // pred_check
          %p84 = pneg %p33
        $region18: #{tpu_custom_call.1} parent=15 // pred_check_branch
          %86 = sbr.rel (%p84) target = $region20
        $region19: #{tpu_custom_call.1} parent=15 // pred_region
          %s87 = sand.u32 %s23, 1
          %s88 = scalar_lea.sflag [#allocation3], %s87
          %s89 = sand.u32 %s23, 1
          %s90 = smul.addr %s89, 2048
          %s91 = scalar_lea.vmem [#allocation2], %s90
          %s92 = smul.u32 256, %s13
          %s94 = ssub.s32 32768, 32768
          %95 = vsyncadd %s88, %s94
          %s96 = smul.addr %s92, 128
          %s97 = scalar_lea.hbm %s0, %s96
          %s98 = sshll.u32 %s91, 4
          %s99 = int_to_ptr.vmem [resolvable:$true] %s98
          %104 = dma.hbm_to_vmem [thread:$0]  %s97, 32768, %s99, %s88, 128, 128, 8
        $region20: #{tpu_custom_call.1} parent=15 // pred_fallthru
          _
      $region16: #{tpu_custom_call.1} parent=5 // pred_fallthru
        _
      %p105 = scmp.le.s32.totalorder 1, %s13
      %p106 = scmp.lt.s32.totalorder %s13, 3
      %p107 = pnand %p105, %p106
      %p108 = pneg %p107
      // Predicated region
      $region21: #{tpu_custom_call.1} parent=5 // pred_check
        _
      $region22: #{tpu_custom_call.1} parent=5 // pred_check_branch
        %110 = sbr.rel (%p107) target = $region24
      $region23: #{tpu_custom_call.1} parent=5 // pred_region
        %s111 = ssub.s32 %s13, 1
        %s112 = sand.u32 %s26, 1
        %s113 = scalar_lea.sflag [#allocation3], %s112
        %s114 = sand.u32 %s26, 1
        %s115 = smul.addr %s114, 2048
        %s116 = scalar_lea.vmem [#allocation2], %s115
        // Predicated region
        $region25: #{tpu_custom_call.1} parent=23 // pred_check
          %p117 = pneg %p39
        $region26: #{tpu_custom_call.1} parent=23 // pred_check_branch
          %119 = sbr.rel (%p117) target = $region28
        $region27: #{tpu_custom_call.1} parent=23 // pred_region
          %120 = dma.done %s113, 32768
        $region28: #{tpu_custom_call.1} parent=23 // pred_fallthru
          _
        %s121 = sand.u32 %s26, 1
        %s122 = scalar_lea.sflag [#allocation3], %s121
        %s123 = sand.u32 %s26, 1
        %s124 = smul.addr %s123, 2048
        %s125 = scalar_lea.vmem [#allocation2], %s124
        %p126 = pneg %p39
        %p127 = pneg %p36
        %p128 = pneg %p65
        %p129 = pneg %p62
        %s130 = sand.u32 %s52, 1
        %s131 = scalar_lea.sflag [#allocation4], %s130
        %s132 = sand.u32 %s52, 1
        %s133 = smul.addr %s132, 2048
        %s134 = scalar_lea.vmem [#allocation5], %s133
        %s135 = smul.u32 256, %s18
        %s136 = smul.u32 256, %s18
        %v137 = vld [vmem:[%s116] sm:$0xff]
        %v138 = vld [vmem:[%s116 + $0x8] sm:$0xff]
        %v139 = vld [vmem:[%s116 + $0x10] sm:$0xff]
        %v140 = vld [vmem:[%s116 + $0x18] sm:$0xff]
        %v141 = vld [vmem:[%s116 + $0x20] sm:$0xff]
        %v142 = vld [vmem:[%s116 + $0x28] sm:$0xff]
        %v143 = vld [vmem:[%s116 + $0x30] sm:$0xff]
        %v144 = vld [vmem:[%s116 + $0x38] sm:$0xff]
        %v145 = vld [vmem:[%s116 + $0x40] sm:$0xff]
        %v146 = vld [vmem:[%s116 + $0x48] sm:$0xff]
        %v147 = vld [vmem:[%s116 + $0x50] sm:$0xff]
        %v148 = vld [vmem:[%s116 + $0x58] sm:$0xff]
        %v149 = vld [vmem:[%s116 + $0x60] sm:$0xff]
        %v150 = vld [vmem:[%s116 + $0x68] sm:$0xff]
        %v151 = vld [vmem:[%s116 + $0x70] sm:$0xff]
        %v152 = vld [vmem:[%s116 + $0x78] sm:$0xff]
        %v153 = vld [vmem:[%s116 + $0x80] sm:$0xff]
        %v154 = vld [vmem:[%s116 + $0x88] sm:$0xff]
        %v155 = vld [vmem:[%s116 + $0x90] sm:$0xff]
        %v156 = vld [vmem:[%s116 + $0x98] sm:$0xff]
        %v157 = vld [vmem:[%s116 + $0xa0] sm:$0xff]
        %v158 = vld [vmem:[%s116 + $0xa8] sm:$0xff]
        %v159 = vld [vmem:[%s116 + $0xb0] sm:$0xff]
        %v160 = vld [vmem:[%s116 + $0xb8] sm:$0xff]
        %v161 = vld [vmem:[%s116 + $0xc0] sm:$0xff]
        %v162 = vld [vmem:[%s116 + $0xc8] sm:$0xff]
        %v163 = vld [vmem:[%s116 + $0xd0] sm:$0xff]
        %v164 = vld [vmem:[%s116 + $0xd8] sm:$0xff]
        %v165 = vld [vmem:[%s116 + $0xe0] sm:$0xff]
        %v166 = vld [vmem:[%s116 + $0xe8] sm:$0xff]
        %v167 = vld [vmem:[%s116 + $0xf0] sm:$0xff]
        %v168 = vld [vmem:[%s116 + $0xf8] sm:$0xff]
        %v169 = vld [vmem:[%s116 + $0x100] sm:$0xff]
        %v170 = vld [vmem:[%s116 + $0x108] sm:$0xff]
        %v171 = vld [vmem:[%s116 + $0x110] sm:$0xff]
        %v172 = vld [vmem:[%s116 + $0x118] sm:$0xff]
        %v173 = vld [vmem:[%s116 + $0x120] sm:$0xff]
        %v174 = vld [vmem:[%s116 + $0x128] sm:$0xff]
        %v175 = vld [vmem:[%s116 + $0x130] sm:$0xff]
        %v176 = vld [vmem:[%s116 + $0x138] sm:$0xff]
        %v177 = vld [vmem:[%s116 + $0x140] sm:$0xff]
        %v178 = vld [vmem:[%s116 + $0x148] sm:$0xff]
        %v179 = vld [vmem:[%s116 + $0x150] sm:$0xff]
        %v180 = vld [vmem:[%s116 + $0x158] sm:$0xff]
        %v181 = vld [vmem:[%s116 + $0x160] sm:$0xff]
        %v182 = vld [vmem:[%s116 + $0x168] sm:$0xff]
        %v183 = vld [vmem:[%s116 + $0x170] sm:$0xff]
        %v184 = vld [vmem:[%s116 + $0x178] sm:$0xff]
        %v185 = vld [vmem:[%s116 + $0x180] sm:$0xff]
        %v186 = vld [vmem:[%s116 + $0x188] sm:$0xff]
        %v187 = vld [vmem:[%s116 + $0x190] sm:$0xff]
        %v188 = vld [vmem:[%s116 + $0x198] sm:$0xff]
        %v189 = vld [vmem:[%s116 + $0x1a0] sm:$0xff]
        %v190 = vld [vmem:[%s116 + $0x1a8] sm:$0xff]
        %v191 = vld [vmem:[%s116 + $0x1b0] sm:$0xff]
        %v192 = vld [vmem:[%s116 + $0x1b8] sm:$0xff]
        %v193 = vld [vmem:[%s116 + $0x1c0] sm:$0xff]
        %v194 = vld [vmem:[%s116 + $0x1c8] sm:$0xff]
        %v195 = vld [vmem:[%s116 + $0x1d0] sm:$0xff]
        %v196 = vld [vmem:[%s116 + $0x1d8] sm:$0xff]
        %v197 = vld [vmem:[%s116 + $0x1e0] sm:$0xff]
        %v198 = vld [vmem:[%s116 + $0x1e8] sm:$0xff]
        %v199 = vld [vmem:[%s116 + $0x1f0] sm:$0xff]
        %v200 = vld [vmem:[%s116 + $0x1f8] sm:$0xff]
        %v201 = vld [vmem:[%s116 + $0x200] sm:$0xff]
        %v202 = vld [vmem:[%s116 + $0x208] sm:$0xff]
        %v203 = vld [vmem:[%s116 + $0x210] sm:$0xff]
        %v204 = vld [vmem:[%s116 + $0x218] sm:$0xff]
        %v205 = vld [vmem:[%s116 + $0x220] sm:$0xff]
        %v206 = vld [vmem:[%s116 + $0x228] sm:$0xff]
        %v207 = vld [vmem:[%s116 + $0x230] sm:$0xff]
        %v208 = vld [vmem:[%s116 + $0x238] sm:$0xff]
        %v209 = vld [vmem:[%s116 + $0x240] sm:$0xff]
        %v210 = vld [vmem:[%s116 + $0x248] sm:$0xff]
        %v211 = vld [vmem:[%s116 + $0x250] sm:$0xff]
        %v212 = vld [vmem:[%s116 + $0x258] sm:$0xff]
        %v213 = vld [vmem:[%s116 + $0x260] sm:$0xff]
        %v214 = vld [vmem:[%s116 + $0x268] sm:$0xff]
        %v215 = vld [vmem:[%s116 + $0x270] sm:$0xff]
        %v216 = vld [vmem:[%s116 + $0x278] sm:$0xff]
        %v217 = vld [vmem:[%s116 + $0x280] sm:$0xff]
        %v218 = vld [vmem:[%s116 + $0x288] sm:$0xff]
        %v219 = vld [vmem:[%s116 + $0x290] sm:$0xff]
        %v220 = vld [vmem:[%s116 + $0x298] sm:$0xff]
        %v221 = vld [vmem:[%s116 + $0x2a0] sm:$0xff]
        %v222 = vld [vmem:[%s116 + $0x2a8] sm:$0xff]
        %v223 = vld [vmem:[%s116 + $0x2b0] sm:$0xff]
        %v224 = vld [vmem:[%s116 + $0x2b8] sm:$0xff]
        %v225 = vld [vmem:[%s116 + $0x2c0] sm:$0xff]
        %v226 = vld [vmem:[%s116 + $0x2c8] sm:$0xff]
        %v227 = vld [vmem:[%s116 + $0x2d0] sm:$0xff]
        %v228 = vld [vmem:[%s116 + $0x2d8] sm:$0xff]
        %v229 = vld [vmem:[%s116 + $0x2e0] sm:$0xff]
        %v230 = vld [vmem:[%s116 + $0x2e8] sm:$0xff]
        %v231 = vld [vmem:[%s116 + $0x2f0] sm:$0xff]
        %v232 = vld [vmem:[%s116 + $0x2f8] sm:$0xff]
        %v233 = vld [vmem:[%s116 + $0x300] sm:$0xff]
        %v234 = vld [vmem:[%s116 + $0x308] sm:$0xff]
        %v235 = vld [vmem:[%s116 + $0x310] sm:$0xff]
        %v236 = vld [vmem:[%s116 + $0x318] sm:$0xff]
        %v237 = vld [vmem:[%s116 + $0x320] sm:$0xff]
        %v238 = vld [vmem:[%s116 + $0x328] sm:$0xff]
        %v239 = vld [vmem:[%s116 + $0x330] sm:$0xff]
        %v240 = vld [vmem:[%s116 + $0x338] sm:$0xff]
        %v241 = vld [vmem:[%s116 + $0x340] sm:$0xff]
        %v242 = vld [vmem:[%s116 + $0x348] sm:$0xff]
        %v243 = vld [vmem:[%s116 + $0x350] sm:$0xff]
        %v244 = vld [vmem:[%s116 + $0x358] sm:$0xff]
        %v245 = vld [vmem:[%s116 + $0x360] sm:$0xff]
        %v246 = vld [vmem:[%s116 + $0x368] sm:$0xff]
        %v247 = vld [vmem:[%s116 + $0x370] sm:$0xff]
        %v248 = vld [vmem:[%s116 + $0x378] sm:$0xff]
        %v249 = vld [vmem:[%s116 + $0x380] sm:$0xff]
        %v250 = vld [vmem:[%s116 + $0x388] sm:$0xff]
        %v251 = vld [vmem:[%s116 + $0x390] sm:$0xff]
        %v252 = vld [vmem:[%s116 + $0x398] sm:$0xff]
        %v253 = vld [vmem:[%s116 + $0x3a0] sm:$0xff]
        %v254 = vld [vmem:[%s116 + $0x3a8] sm:$0xff]
        %v255 = vld [vmem:[%s116 + $0x3b0] sm:$0xff]
        %v256 = vld [vmem:[%s116 + $0x3b8] sm:$0xff]
        %v257 = vld [vmem:[%s116 + $0x3c0] sm:$0xff]
        %v258 = vld [vmem:[%s116 + $0x3c8] sm:$0xff]
        %v259 = vld [vmem:[%s116 + $0x3d0] sm:$0xff]
        %v260 = vld [vmem:[%s116 + $0x3d8] sm:$0xff]
        %v261 = vld [vmem:[%s116 + $0x3e0] sm:$0xff]
        %v262 = vld [vmem:[%s116 + $0x3e8] sm:$0xff]
        %v263 = vld [vmem:[%s116 + $0x3f0] sm:$0xff]
        %v264 = vld [vmem:[%s116 + $0x3f8] sm:$0xff]
        %v265 = vld [vmem:[%s116 + $0x400] sm:$0xff]
        %v266 = vld [vmem:[%s116 + $0x408] sm:$0xff]
        %v267 = vld [vmem:[%s116 + $0x410] sm:$0xff]
        %v268 = vld [vmem:[%s116 + $0x418] sm:$0xff]
        %v269 = vld [vmem:[%s116 + $0x420] sm:$0xff]
        %v270 = vld [vmem:[%s116 + $0x428] sm:$0xff]
        %v271 = vld [vmem:[%s116 + $0x430] sm:$0xff]
        %v272 = vld [vmem:[%s116 + $0x438] sm:$0xff]
        %v273 = vld [vmem:[%s116 + $0x440] sm:$0xff]
        %v274 = vld [vmem:[%s116 + $0x448] sm:$0xff]
        %v275 = vld [vmem:[%s116 + $0x450] sm:$0xff]
        %v276 = vld [vmem:[%s116 + $0x458] sm:$0xff]
        %v277 = vld [vmem:[%s116 + $0x460] sm:$0xff]
        %v278 = vld [vmem:[%s116 + $0x468] sm:$0xff]
        %v279 = vld [vmem:[%s116 + $0x470] sm:$0xff]
        %v280 = vld [vmem:[%s116 + $0x478] sm:$0xff]
        %v281 = vld [vmem:[%s116 + $0x480] sm:$0xff]
        %v282 = vld [vmem:[%s116 + $0x488] sm:$0xff]
        %v283 = vld [vmem:[%s116 + $0x490] sm:$0xff]
        %v284 = vld [vmem:[%s116 + $0x498] sm:$0xff]
        %v285 = vld [vmem:[%s116 + $0x4a0] sm:$0xff]
        %v286 = vld [vmem:[%s116 + $0x4a8] sm:$0xff]
        %v287 = vld [vmem:[%s116 + $0x4b0] sm:$0xff]
        %v288 = vld [vmem:[%s116 + $0x4b8] sm:$0xff]
        %v289 = vld [vmem:[%s116 + $0x4c0] sm:$0xff]
        %v290 = vld [vmem:[%s116 + $0x4c8] sm:$0xff]
        %v291 = vld [vmem:[%s116 + $0x4d0] sm:$0xff]
        %v292 = vld [vmem:[%s116 + $0x4d8] sm:$0xff]
        %v293 = vld [vmem:[%s116 + $0x4e0] sm:$0xff]
        %v294 = vld [vmem:[%s116 + $0x4e8] sm:$0xff]
        %v295 = vld [vmem:[%s116 + $0x4f0] sm:$0xff]
        %v296 = vld [vmem:[%s116 + $0x4f8] sm:$0xff]
        %v297 = vld [vmem:[%s116 + $0x500] sm:$0xff]
        %v298 = vld [vmem:[%s116 + $0x508] sm:$0xff]
        %v299 = vld [vmem:[%s116 + $0x510] sm:$0xff]
        %v300 = vld [vmem:[%s116 + $0x518] sm:$0xff]
        %v301 = vld [vmem:[%s116 + $0x520] sm:$0xff]
        %v302 = vld [vmem:[%s116 + $0x528] sm:$0xff]
        %v303 = vld [vmem:[%s116 + $0x530] sm:$0xff]
        %v304 = vld [vmem:[%s116 + $0x538] sm:$0xff]
        %v305 = vld [vmem:[%s116 + $0x540] sm:$0xff]
        %v306 = vld [vmem:[%s116 + $0x548] sm:$0xff]
        %v307 = vld [vmem:[%s116 + $0x550] sm:$0xff]
        %v308 = vld [vmem:[%s116 + $0x558] sm:$0xff]
        %v309 = vld [vmem:[%s116 + $0x560] sm:$0xff]
        %v310 = vld [vmem:[%s116 + $0x568] sm:$0xff]
        %v311 = vld [vmem:[%s116 + $0x570] sm:$0xff]
        %v312 = vld [vmem:[%s116 + $0x578] sm:$0xff]
        %v313 = vld [vmem:[%s116 + $0x580] sm:$0xff]
        %v314 = vld [vmem:[%s116 + $0x588] sm:$0xff]
        %v315 = vld [vmem:[%s116 + $0x590] sm:$0xff]
        %v316 = vld [vmem:[%s116 + $0x598] sm:$0xff]
        %v317 = vld [vmem:[%s116 + $0x5a0] sm:$0xff]
        %v318 = vld [vmem:[%s116 + $0x5a8] sm:$0xff]
        %v319 = vld [vmem:[%s116 + $0x5b0] sm:$0xff]
        %v320 = vld [vmem:[%s116 + $0x5b8] sm:$0xff]
        %v321 = vld [vmem:[%s116 + $0x5c0] sm:$0xff]
        %v322 = vld [vmem:[%s116 + $0x5c8] sm:$0xff]
        %v323 = vld [vmem:[%s116 + $0x5d0] sm:$0xff]
        %v324 = vld [vmem:[%s116 + $0x5d8] sm:$0xff]
        %v325 = vld [vmem:[%s116 + $0x5e0] sm:$0xff]
        %v326 = vld [vmem:[%s116 + $0x5e8] sm:$0xff]
        %v327 = vld [vmem:[%s116 + $0x5f0] sm:$0xff]
        %v328 = vld [vmem:[%s116 + $0x5f8] sm:$0xff]
        %v329 = vld [vmem:[%s116 + $0x600] sm:$0xff]
        %v330 = vld [vmem:[%s116 + $0x608] sm:$0xff]
        %v331 = vld [vmem:[%s116 + $0x610] sm:$0xff]
        %v332 = vld [vmem:[%s116 + $0x618] sm:$0xff]
        %v333 = vld [vmem:[%s116 + $0x620] sm:$0xff]
        %v334 = vld [vmem:[%s116 + $0x628] sm:$0xff]
        %v335 = vld [vmem:[%s116 + $0x630] sm:$0xff]
        %v336 = vld [vmem:[%s116 + $0x638] sm:$0xff]
        %v337 = vld [vmem:[%s116 + $0x640] sm:$0xff]
        %v338 = vld [vmem:[%s116 + $0x648] sm:$0xff]
        %v339 = vld [vmem:[%s116 + $0x650] sm:$0xff]
        %v340 = vld [vmem:[%s116 + $0x658] sm:$0xff]
        %v341 = vld [vmem:[%s116 + $0x660] sm:$0xff]
        %v342 = vld [vmem:[%s116 + $0x668] sm:$0xff]
        %v343 = vld [vmem:[%s116 + $0x670] sm:$0xff]
        %v344 = vld [vmem:[%s116 + $0x678] sm:$0xff]
        %v345 = vld [vmem:[%s116 + $0x680] sm:$0xff]
        %v346 = vld [vmem:[%s116 + $0x688] sm:$0xff]
        %v347 = vld [vmem:[%s116 + $0x690] sm:$0xff]
        %v348 = vld [vmem:[%s116 + $0x698] sm:$0xff]
        %v349 = vld [vmem:[%s116 + $0x6a0] sm:$0xff]
        %v350 = vld [vmem:[%s116 + $0x6a8] sm:$0xff]
        %v351 = vld [vmem:[%s116 + $0x6b0] sm:$0xff]
        %v352 = vld [vmem:[%s116 + $0x6b8] sm:$0xff]
        %v353 = vld [vmem:[%s116 + $0x6c0] sm:$0xff]
        %v354 = vld [vmem:[%s116 + $0x6c8] sm:$0xff]
        %v355 = vld [vmem:[%s116 + $0x6d0] sm:$0xff]
        %v356 = vld [vmem:[%s116 + $0x6d8] sm:$0xff]
        %v357 = vld [vmem:[%s116 + $0x6e0] sm:$0xff]
        %v358 = vld [vmem:[%s116 + $0x6e8] sm:$0xff]
        %v359 = vld [vmem:[%s116 + $0x6f0] sm:$0xff]
        %v360 = vld [vmem:[%s116 + $0x6f8] sm:$0xff]
        %v361 = vld [vmem:[%s116 + $0x700] sm:$0xff]
        %v362 = vld [vmem:[%s116 + $0x708] sm:$0xff]
        %v363 = vld [vmem:[%s116 + $0x710] sm:$0xff]
        %v364 = vld [vmem:[%s116 + $0x718] sm:$0xff]
        %v365 = vld [vmem:[%s116 + $0x720] sm:$0xff]
        %v366 = vld [vmem:[%s116 + $0x728] sm:$0xff]
        %v367 = vld [vmem:[%s116 + $0x730] sm:$0xff]
        %v368 = vld [vmem:[%s116 + $0x738] sm:$0xff]
        %v369 = vld [vmem:[%s116 + $0x740] sm:$0xff]
        %v370 = vld [vmem:[%s116 + $0x748] sm:$0xff]
        %v371 = vld [vmem:[%s116 + $0x750] sm:$0xff]
        %v372 = vld [vmem:[%s116 + $0x758] sm:$0xff]
        %v373 = vld [vmem:[%s116 + $0x760] sm:$0xff]
        %v374 = vld [vmem:[%s116 + $0x768] sm:$0xff]
        %v375 = vld [vmem:[%s116 + $0x770] sm:$0xff]
        %v376 = vld [vmem:[%s116 + $0x778] sm:$0xff]
        %v377 = vld [vmem:[%s116 + $0x780] sm:$0xff]
        %v378 = vld [vmem:[%s116 + $0x788] sm:$0xff]
        %v379 = vld [vmem:[%s116 + $0x790] sm:$0xff]
        %v380 = vld [vmem:[%s116 + $0x798] sm:$0xff]
        %v381 = vld [vmem:[%s116 + $0x7a0] sm:$0xff]
        %v382 = vld [vmem:[%s116 + $0x7a8] sm:$0xff]
        %v383 = vld [vmem:[%s116 + $0x7b0] sm:$0xff]
        %v384 = vld [vmem:[%s116 + $0x7b8] sm:$0xff]
        %v385 = vld [vmem:[%s116 + $0x7c0] sm:$0xff]
        %v386 = vld [vmem:[%s116 + $0x7c8] sm:$0xff]
        %v387 = vld [vmem:[%s116 + $0x7d0] sm:$0xff]
        %v388 = vld [vmem:[%s116 + $0x7d8] sm:$0xff]
        %v389 = vld [vmem:[%s116 + $0x7e0] sm:$0xff]
        %v390 = vld [vmem:[%s116 + $0x7e8] sm:$0xff]
        %v391 = vld [vmem:[%s116 + $0x7f0] sm:$0xff]
        %v392 = vld [vmem:[%s116 + $0x7f8] sm:$0xff]
        %393 = vst [vmem:[%s134] sm:$0xff] %v137
        %394 = vst [vmem:[%s134 + $0x8] sm:$0xff] %v138
        %395 = vst [vmem:[%s134 + $0x10] sm:$0xff] %v139
        %396 = vst [vmem:[%s134 + $0x18] sm:$0xff] %v140
        %397 = vst [vmem:[%s134 + $0x20] sm:$0xff] %v141
        %398 = vst [vmem:[%s134 + $0x28] sm:$0xff] %v142
        %399 = vst [vmem:[%s134 + $0x30] sm:$0xff] %v143
        %400 = vst [vmem:[%s134 + $0x38] sm:$0xff] %v144
        %401 = vst [vmem:[%s134 + $0x40] sm:$0xff] %v145
        %402 = vst [vmem:[%s134 + $0x48] sm:$0xff] %v146
        %403 = vst [vmem:[%s134 + $0x50] sm:$0xff] %v147
        %404 = vst [vmem:[%s134 + $0x58] sm:$0xff] %v148
        %405 = vst [vmem:[%s134 + $0x60] sm:$0xff] %v149
        %406 = vst [vmem:[%s134 + $0x68] sm:$0xff] %v150
        %407 = vst [vmem:[%s134 + $0x70] sm:$0xff] %v151
        %408 = vst [vmem:[%s134 + $0x78] sm:$0xff] %v152
        %409 = vst [vmem:[%s134 + $0x80] sm:$0xff] %v153
        %410 = vst [vmem:[%s134 + $0x88] sm:$0xff] %v154
        %411 = vst [vmem:[%s134 + $0x90] sm:$0xff] %v155
        %412 = vst [vmem:[%s134 + $0x98] sm:$0xff] %v156
        %413 = vst [vmem:[%s134 + $0xa0] sm:$0xff] %v157
        %414 = vst [vmem:[%s134 + $0xa8] sm:$0xff] %v158
        %415 = vst [vmem:[%s134 + $0xb0] sm:$0xff] %v159
        %416 = vst [vmem:[%s134 + $0xb8] sm:$0xff] %v160
        %417 = vst [vmem:[%s134 + $0xc0] sm:$0xff] %v161
        %418 = vst [vmem:[%s134 + $0xc8] sm:$0xff] %v162
        %419 = vst [vmem:[%s134 + $0xd0] sm:$0xff] %v163
        %420 = vst [vmem:[%s134 + $0xd8] sm:$0xff] %v164
        %421 = vst [vmem:[%s134 + $0xe0] sm:$0xff] %v165
        %422 = vst [vmem:[%s134 + $0xe8] sm:$0xff] %v166
        %423 = vst [vmem:[%s134 + $0xf0] sm:$0xff] %v167
        %424 = vst [vmem:[%s134 + $0xf8] sm:$0xff] %v168
        %425 = vst [vmem:[%s134 + $0x100] sm:$0xff] %v169
        %426 = vst [vmem:[%s134 + $0x108] sm:$0xff] %v170
        %427 = vst [vmem:[%s134 + $0x110] sm:$0xff] %v171
        %428 = vst [vmem:[%s134 + $0x118] sm:$0xff] %v172
        %429 = vst [vmem:[%s134 + $0x120] sm:$0xff] %v173
        %430 = vst [vmem:[%s134 + $0x128] sm:$0xff] %v174
        %431 = vst [vmem:[%s134 + $0x130] sm:$0xff] %v175
        %432 = vst [vmem:[%s134 + $0x138] sm:$0xff] %v176
        %433 = vst [vmem:[%s134 + $0x140] sm:$0xff] %v177
        %434 = vst [vmem:[%s134 + $0x148] sm:$0xff] %v178
        %435 = vst [vmem:[%s134 + $0x150] sm:$0xff] %v179
        %436 = vst [vmem:[%s134 + $0x158] sm:$0xff] %v180
        %437 = vst [vmem:[%s134 + $0x160] sm:$0xff] %v181
        %438 = vst [vmem:[%s134 + $0x168] sm:$0xff] %v182
        %439 = vst [vmem:[%s134 + $0x170] sm:$0xff] %v183
        %440 = vst [vmem:[%s134 + $0x178] sm:$0xff] %v184
        %441 = vst [vmem:[%s134 + $0x180] sm:$0xff] %v185
        %442 = vst [vmem:[%s134 + $0x188] sm:$0xff] %v186
        %443 = vst [vmem:[%s134 + $0x190] sm:$0xff] %v187
        %444 = vst [vmem:[%s134 + $0x198] sm:$0xff] %v188
        %445 = vst [vmem:[%s134 + $0x1a0] sm:$0xff] %v189
        %446 = vst [vmem:[%s134 + $0x1a8] sm:$0xff] %v190
        %447 = vst [vmem:[%s134 + $0x1b0] sm:$0xff] %v191
        %448 = vst [vmem:[%s134 + $0x1b8] sm:$0xff] %v192
        %449 = vst [vmem:[%s134 + $0x1c0] sm:$0xff] %v193
        %450 = vst [vmem:[%s134 + $0x1c8] sm:$0xff] %v194
        %451 = vst [vmem:[%s134 + $0x1d0] sm:$0xff] %v195
        %452 = vst [vmem:[%s134 + $0x1d8] sm:$0xff] %v196
        %453 = vst [vmem:[%s134 + $0x1e0] sm:$0xff] %v197
        %454 = vst [vmem:[%s134 + $0x1e8] sm:$0xff] %v198
        %455 = vst [vmem:[%s134 + $0x1f0] sm:$0xff] %v199
        %456 = vst [vmem:[%s134 + $0x1f8] sm:$0xff] %v200
        %457 = vst [vmem:[%s134 + $0x200] sm:$0xff] %v201
        %458 = vst [vmem:[%s134 + $0x208] sm:$0xff] %v202
        %459 = vst [vmem:[%s134 + $0x210] sm:$0xff] %v203
        %460 = vst [vmem:[%s134 + $0x218] sm:$0xff] %v204
        %461 = vst [vmem:[%s134 + $0x220] sm:$0xff] %v205
        %462 = vst [vmem:[%s134 + $0x228] sm:$0xff] %v206
        %463 = vst [vmem:[%s134 + $0x230] sm:$0xff] %v207
        %464 = vst [vmem:[%s134 + $0x238] sm:$0xff] %v208
        %465 = vst [vmem:[%s134 + $0x240] sm:$0xff] %v209
        %466 = vst [vmem:[%s134 + $0x248] sm:$0xff] %v210
        %467 = vst [vmem:[%s134 + $0x250] sm:$0xff] %v211
        %468 = vst [vmem:[%s134 + $0x258] sm:$0xff] %v212
        %469 = vst [vmem:[%s134 + $0x260] sm:$0xff] %v213
        %470 = vst [vmem:[%s134 + $0x268] sm:$0xff] %v214
        %471 = vst [vmem:[%s134 + $0x270] sm:$0xff] %v215
        %472 = vst [vmem:[%s134 + $0x278] sm:$0xff] %v216
        %473 = vst [vmem:[%s134 + $0x280] sm:$0xff] %v217
        %474 = vst [vmem:[%s134 + $0x288] sm:$0xff] %v218
        %475 = vst [vmem:[%s134 + $0x290] sm:$0xff] %v219
        %476 = vst [vmem:[%s134 + $0x298] sm:$0xff] %v220
        %477 = vst [vmem:[%s134 + $0x2a0] sm:$0xff] %v221
        %478 = vst [vmem:[%s134 + $0x2a8] sm:$0xff] %v222
        %479 = vst [vmem:[%s134 + $0x2b0] sm:$0xff] %v223
        %480 = vst [vmem:[%s134 + $0x2b8] sm:$0xff] %v224
        %481 = vst [vmem:[%s134 + $0x2c0] sm:$0xff] %v225
        %482 = vst [vmem:[%s134 + $0x2c8] sm:$0xff] %v226
        %483 = vst [vmem:[%s134 + $0x2d0] sm:$0xff] %v227
        %484 = vst [vmem:[%s134 + $0x2d8] sm:$0xff] %v228
        %485 = vst [vmem:[%s134 + $0x2e0] sm:$0xff] %v229
        %486 = vst [vmem:[%s134 + $0x2e8] sm:$0xff] %v230
        %487 = vst [vmem:[%s134 + $0x2f0] sm:$0xff] %v231
        %488 = vst [vmem:[%s134 + $0x2f8] sm:$0xff] %v232
        %489 = vst [vmem:[%s134 + $0x300] sm:$0xff] %v233
        %490 = vst [vmem:[%s134 + $0x308] sm:$0xff] %v234
        %491 = vst [vmem:[%s134 + $0x310] sm:$0xff] %v235
        %492 = vst [vmem:[%s134 + $0x318] sm:$0xff] %v236
        %493 = vst [vmem:[%s134 + $0x320] sm:$0xff] %v237
        %494 = vst [vmem:[%s134 + $0x328] sm:$0xff] %v238
        %495 = vst [vmem:[%s134 + $0x330] sm:$0xff] %v239
        %496 = vst [vmem:[%s134 + $0x338] sm:$0xff] %v240
        %497 = vst [vmem:[%s134 + $0x340] sm:$0xff] %v241
        %498 = vst [vmem:[%s134 + $0x348] sm:$0xff] %v242
        %499 = vst [vmem:[%s134 + $0x350] sm:$0xff] %v243
        %500 = vst [vmem:[%s134 + $0x358] sm:$0xff] %v244
        %501 = vst [vmem:[%s134 + $0x360] sm:$0xff] %v245
        %502 = vst [vmem:[%s134 + $0x368] sm:$0xff] %v246
        %503 = vst [vmem:[%s134 + $0x370] sm:$0xff] %v247
        %504 = vst [vmem:[%s134 + $0x378] sm:$0xff] %v248
        %505 = vst [vmem:[%s134 + $0x380] sm:$0xff] %v249
        %506 = vst [vmem:[%s134 + $0x388] sm:$0xff] %v250
        %507 = vst [vmem:[%s134 + $0x390] sm:$0xff] %v251
        %508 = vst [vmem:[%s134 + $0x398] sm:$0xff] %v252
        %509 = vst [vmem:[%s134 + $0x3a0] sm:$0xff] %v253
        %510 = vst [vmem:[%s134 + $0x3a8] sm:$0xff] %v254
        %511 = vst [vmem:[%s134 + $0x3b0] sm:$0xff] %v255
        %512 = vst [vmem:[%s134 + $0x3b8] sm:$0xff] %v256
        %513 = vst [vmem:[%s134 + $0x3c0] sm:$0xff] %v257
        %514 = vst [vmem:[%s134 + $0x3c8] sm:$0xff] %v258
        %515 = vst [vmem:[%s134 + $0x3d0] sm:$0xff] %v259
        %516 = vst [vmem:[%s134 + $0x3d8] sm:$0xff] %v260
        %517 = vst [vmem:[%s134 + $0x3e0] sm:$0xff] %v261
        %518 = vst [vmem:[%s134 + $0x3e8] sm:$0xff] %v262
        %519 = vst [vmem:[%s134 + $0x3f0] sm:$0xff] %v263
        %520 = vst [vmem:[%s134 + $0x3f8] sm:$0xff] %v264
        %521 = vst [vmem:[%s134 + $0x400] sm:$0xff] %v265
        %522 = vst [vmem:[%s134 + $0x408] sm:$0xff] %v266
        %523 = vst [vmem:[%s134 + $0x410] sm:$0xff] %v267
        %524 = vst [vmem:[%s134 + $0x418] sm:$0xff] %v268
        %525 = vst [vmem:[%s134 + $0x420] sm:$0xff] %v269
        %526 = vst [vmem:[%s134 + $0x428] sm:$0xff] %v270
        %527 = vst [vmem:[%s134 + $0x430] sm:$0xff] %v271
        %528 = vst [vmem:[%s134 + $0x438] sm:$0xff] %v272
        %529 = vst [vmem:[%s134 + $0x440] sm:$0xff] %v273
        %530 = vst [vmem:[%s134 + $0x448] sm:$0xff] %v274
        %531 = vst [vmem:[%s134 + $0x450] sm:$0xff] %v275
        %532 = vst [vmem:[%s134 + $0x458] sm:$0xff] %v276
        %533 = vst [vmem:[%s134 + $0x460] sm:$0xff] %v277
        %534 = vst [vmem:[%s134 + $0x468] sm:$0xff] %v278
        %535 = vst [vmem:[%s134 + $0x470] sm:$0xff] %v279
        %536 = vst [vmem:[%s134 + $0x478] sm:$0xff] %v280
        %537 = vst [vmem:[%s134 + $0x480] sm:$0xff] %v281
        %538 = vst [vmem:[%s134 + $0x488] sm:$0xff] %v282
        %539 = vst [vmem:[%s134 + $0x490] sm:$0xff] %v283
        %540 = vst [vmem:[%s134 + $0x498] sm:$0xff] %v284
        %541 = vst [vmem:[%s134 + $0x4a0] sm:$0xff] %v285
        %542 = vst [vmem:[%s134 + $0x4a8] sm:$0xff] %v286
        %543 = vst [vmem:[%s134 + $0x4b0] sm:$0xff] %v287
        %544 = vst [vmem:[%s134 + $0x4b8] sm:$0xff] %v288
        %545 = vst [vmem:[%s134 + $0x4c0] sm:$0xff] %v289
        %546 = vst [vmem:[%s134 + $0x4c8] sm:$0xff] %v290
        %547 = vst [vmem:[%s134 + $0x4d0] sm:$0xff] %v291
        %548 = vst [vmem:[%s134 + $0x4d8] sm:$0xff] %v292
        %549 = vst [vmem:[%s134 + $0x4e0] sm:$0xff] %v293
        %550 = vst [vmem:[%s134 + $0x4e8] sm:$0xff] %v294
        %551 = vst [vmem:[%s134 + $0x4f0] sm:$0xff] %v295
        %552 = vst [vmem:[%s134 + $0x4f8] sm:$0xff] %v296
        %553 = vst [vmem:[%s134 + $0x500] sm:$0xff] %v297
        %554 = vst [vmem:[%s134 + $0x508] sm:$0xff] %v298
        %555 = vst [vmem:[%s134 + $0x510] sm:$0xff] %v299
        %556 = vst [vmem:[%s134 + $0x518] sm:$0xff] %v300
        %557 = vst [vmem:[%s134 + $0x520] sm:$0xff] %v301
        %558 = vst [vmem:[%s134 + $0x528] sm:$0xff] %v302
        %559 = vst [vmem:[%s134 + $0x530] sm:$0xff] %v303
        %560 = vst [vmem:[%s134 + $0x538] sm:$0xff] %v304
        %561 = vst [vmem:[%s134 + $0x540] sm:$0xff] %v305
        %562 = vst [vmem:[%s134 + $0x548] sm:$0xff] %v306
        %563 = vst [vmem:[%s134 + $0x550] sm:$0xff] %v307
        %564 = vst [vmem:[%s134 + $0x558] sm:$0xff] %v308
        %565 = vst [vmem:[%s134 + $0x560] sm:$0xff] %v309
        %566 = vst [vmem:[%s134 + $0x568] sm:$0xff] %v310
        %567 = vst [vmem:[%s134 + $0x570] sm:$0xff] %v311
        %568 = vst [vmem:[%s134 + $0x578] sm:$0xff] %v312
        %569 = vst [vmem:[%s134 + $0x580] sm:$0xff] %v313
        %570 = vst [vmem:[%s134 + $0x588] sm:$0xff] %v314
        %571 = vst [vmem:[%s134 + $0x590] sm:$0xff] %v315
        %572 = vst [vmem:[%s134 + $0x598] sm:$0xff] %v316
        %573 = vst [vmem:[%s134 + $0x5a0] sm:$0xff] %v317
        %574 = vst [vmem:[%s134 + $0x5a8] sm:$0xff] %v318
        %575 = vst [vmem:[%s134 + $0x5b0] sm:$0xff] %v319
        %576 = vst [vmem:[%s134 + $0x5b8] sm:$0xff] %v320
        %577 = vst [vmem:[%s134 + $0x5c0] sm:$0xff] %v321
        %578 = vst [vmem:[%s134 + $0x5c8] sm:$0xff] %v322
        %579 = vst [vmem:[%s134 + $0x5d0] sm:$0xff] %v323
        %580 = vst [vmem:[%s134 + $0x5d8] sm:$0xff] %v324
        %581 = vst [vmem:[%s134 + $0x5e0] sm:$0xff] %v325
        %582 = vst [vmem:[%s134 + $0x5e8] sm:$0xff] %v326
        %583 = vst [vmem:[%s134 + $0x5f0] sm:$0xff] %v327
        %584 = vst [vmem:[%s134 + $0x5f8] sm:$0xff] %v328
        %585 = vst [vmem:[%s134 + $0x600] sm:$0xff] %v329
        %586 = vst [vmem:[%s134 + $0x608] sm:$0xff] %v330
        %587 = vst [vmem:[%s134 + $0x610] sm:$0xff] %v331
        %588 = vst [vmem:[%s134 + $0x618] sm:$0xff] %v332
        %589 = vst [vmem:[%s134 + $0x620] sm:$0xff] %v333
        %590 = vst [vmem:[%s134 + $0x628] sm:$0xff] %v334
        %591 = vst [vmem:[%s134 + $0x630] sm:$0xff] %v335
        %592 = vst [vmem:[%s134 + $0x638] sm:$0xff] %v336
        %593 = vst [vmem:[%s134 + $0x640] sm:$0xff] %v337
        %594 = vst [vmem:[%s134 + $0x648] sm:$0xff] %v338
        %595 = vst [vmem:[%s134 + $0x650] sm:$0xff] %v339
        %596 = vst [vmem:[%s134 + $0x658] sm:$0xff] %v340
        %597 = vst [vmem:[%s134 + $0x660] sm:$0xff] %v341
        %598 = vst [vmem:[%s134 + $0x668] sm:$0xff] %v342
        %599 = vst [vmem:[%s134 + $0x670] sm:$0xff] %v343
        %600 = vst [vmem:[%s134 + $0x678] sm:$0xff] %v344
        %601 = vst [vmem:[%s134 + $0x680] sm:$0xff] %v345
        %602 = vst [vmem:[%s134 + $0x688] sm:$0xff] %v346
        %603 = vst [vmem:[%s134 + $0x690] sm:$0xff] %v347
        %604 = vst [vmem:[%s134 + $0x698] sm:$0xff] %v348
        %605 = vst [vmem:[%s134 + $0x6a0] sm:$0xff] %v349
        %606 = vst [vmem:[%s134 + $0x6a8] sm:$0xff] %v350
        %607 = vst [vmem:[%s134 + $0x6b0] sm:$0xff] %v351
        %608 = vst [vmem:[%s134 + $0x6b8] sm:$0xff] %v352
        %609 = vst [vmem:[%s134 + $0x6c0] sm:$0xff] %v353
        %610 = vst [vmem:[%s134 + $0x6c8] sm:$0xff] %v354
        %611 = vst [vmem:[%s134 + $0x6d0] sm:$0xff] %v355
        %612 = vst [vmem:[%s134 + $0x6d8] sm:$0xff] %v356
        %613 = vst [vmem:[%s134 + $0x6e0] sm:$0xff] %v357
        %614 = vst [vmem:[%s134 + $0x6e8] sm:$0xff] %v358
        %615 = vst [vmem:[%s134 + $0x6f0] sm:$0xff] %v359
        %616 = vst [vmem:[%s134 + $0x6f8] sm:$0xff] %v360
        %617 = vst [vmem:[%s134 + $0x700] sm:$0xff] %v361
        %618 = vst [vmem:[%s134 + $0x708] sm:$0xff] %v362
        %619 = vst [vmem:[%s134 + $0x710] sm:$0xff] %v363
        %620 = vst [vmem:[%s134 + $0x718] sm:$0xff] %v364
        %621 = vst [vmem:[%s134 + $0x720] sm:$0xff] %v365
        %622 = vst [vmem:[%s134 + $0x728] sm:$0xff] %v366
        %623 = vst [vmem:[%s134 + $0x730] sm:$0xff] %v367
        %624 = vst [vmem:[%s134 + $0x738] sm:$0xff] %v368
        %625 = vst [vmem:[%s134 + $0x740] sm:$0xff] %v369
        %626 = vst [vmem:[%s134 + $0x748] sm:$0xff] %v370
        %627 = vst [vmem:[%s134 + $0x750] sm:$0xff] %v371
        %628 = vst [vmem:[%s134 + $0x758] sm:$0xff] %v372
        %629 = vst [vmem:[%s134 + $0x760] sm:$0xff] %v373
        %630 = vst [vmem:[%s134 + $0x768] sm:$0xff] %v374
        %631 = vst [vmem:[%s134 + $0x770] sm:$0xff] %v375
        %632 = vst [vmem:[%s134 + $0x778] sm:$0xff] %v376
        %633 = vst [vmem:[%s134 + $0x780] sm:$0xff] %v377
        %634 = vst [vmem:[%s134 + $0x788] sm:$0xff] %v378
        %635 = vst [vmem:[%s134 + $0x790] sm:$0xff] %v379
        %636 = vst [vmem:[%s134 + $0x798] sm:$0xff] %v380
        %637 = vst [vmem:[%s134 + $0x7a0] sm:$0xff] %v381
        %638 = vst [vmem:[%s134 + $0x7a8] sm:$0xff] %v382
        %639 = vst [vmem:[%s134 + $0x7b0] sm:$0xff] %v383
        %640 = vst [vmem:[%s134 + $0x7b8] sm:$0xff] %v384
        %641 = vst [vmem:[%s134 + $0x7c0] sm:$0xff] %v385
        %642 = vst [vmem:[%s134 + $0x7c8] sm:$0xff] %v386
        %643 = vst [vmem:[%s134 + $0x7d0] sm:$0xff] %v387
        %644 = vst [vmem:[%s134 + $0x7d8] sm:$0xff] %v388
        %645 = vst [vmem:[%s134 + $0x7e0] sm:$0xff] %v389
        %646 = vst [vmem:[%s134 + $0x7e8] sm:$0xff] %v390
        %647 = vst [vmem:[%s134 + $0x7f0] sm:$0xff] %v391
        %648 = vst [vmem:[%s134 + $0x7f8] sm:$0xff] %v392
        %s649 = sand.u32 %s52, 1
        %s650 = scalar_lea.sflag [#allocation4], %s649
        %s651 = sand.u32 %s52, 1
        %s652 = smul.addr %s651, 2048
        %s653 = scalar_lea.vmem [#allocation5], %s652
        // Predicated region
        $region29: #{tpu_custom_call.1} parent=23 // pred_check
          %p654 = pneg %p62
        $region30: #{tpu_custom_call.1} parent=23 // pred_check_branch
          %656 = sbr.rel (%p654) target = $region32
        $region31: #{tpu_custom_call.1} parent=23 // pred_region
          %s657 = smul.u32 256, %s18
          %s659 = ssub.s32 32768, 32768
          %660 = vsyncadd %s650, %s659
          %s661 = smul.addr %s657, 128
          %s662 = scalar_lea.hbm %s1, %s661
          %s663 = sshll.u32 %s653, 4
          %s664 = int_to_ptr.vmem [resolvable:$true] %s663
          %669 = dma.vmem_to_hbm [thread:$0]  %s664, 32768, %s662, %s650, 128, 128, 8
        $region32: #{tpu_custom_call.1} parent=23 // pred_fallthru
          _
      $region24: #{tpu_custom_call.1} parent=5 // pred_fallthru
        _
      %p670 = scmp.le.s32.totalorder 2, %s13
      // Predicated region
      $region33: #{tpu_custom_call.1} parent=5 // pred_check
        %p671 = pneg %p670
      $region34: #{tpu_custom_call.1} parent=5 // pred_check_branch
        %673 = sbr.rel (%p671) target = $region36
      $region35: #{tpu_custom_call.1} parent=5 // pred_region
        %s674 = ssub.s32 %s13, 2
        // Predicated region
        $region37: #{tpu_custom_call.1} parent=35 // pred_check
          %p675 = pneg %p68
        $region38: #{tpu_custom_call.1} parent=35 // pred_check_branch
          %677 = sbr.rel (%p675) target = $region40
        $region39: #{tpu_custom_call.1} parent=35 // pred_region
          %s678 = sand.u32 %s53, 1
          %s679 = scalar_lea.sflag [#allocation4], %s678
          %s680 = sand.u32 %s53, 1
          %s681 = smul.addr %s680, 2048
          %s682 = scalar_lea.vmem [#allocation5], %s681
          %683 = dma.done %s679, 32768
        $region40: #{tpu_custom_call.1} parent=35 // pred_fallthru
          _
      $region36: #{tpu_custom_call.1} parent=5 // pred_fallthru
        _
    $region6: #{tpu_custom_call.1} parent=1 // loop_footer
      %s17 = sadd.s32 1, %s13
    $region7: #{tpu_custom_call.1} parent=1 // loop_footer_branch
      %12 = sbr.rel target = $region3
    $region8: #{tpu_custom_call.1} parent=1 // loop_exit
      _
    %684 = vsyncpa [#allocation3], 1
    %s685 = scalar_lea.sflag [#allocation3], 1
    %686 = vsyncpa %s685, 1
    %687 = vsyncpa [#allocation4], 1
    %s688 = scalar_lea.sflag [#allocation4], 1
    %689 = vsyncpa %s688, 1

</llo_original>
